<compile_context>
chip_gen: v6e
topology: v6e:2x2x1
jax: 0.10.0
libtpu: 0.0.40
codegen_flags: <defaults>
</compile_context>

<pallas_src>
import jax
import jax.numpy as jnp
from jax.experimental import pallas as pl
from jax.experimental.pallas import tpu as pltpu

_TARGET_BLOCK_BYTES = 2 * 1024 * 1024  # ~2 MiB per block


def _act_kernel(x_ref, o_ref):
    # x_ref / o_ref: VMEM (block_rows, lanes)
    x = x_ref[...].astype(jnp.float32)
    o_ref[...] = ((jnp.maximum(x, 0.0) + jnp.tanh(x)) * 0.5).astype(o_ref.dtype)


def act_rt_forward(x):
    """x: float array of any shape (e.g. NCHW). Returns (relu(x)+tanh(x))/2."""
    orig_shape = x.shape
    dtype = x.dtype
    total = x.size
    itemsize = jnp.dtype(dtype).itemsize

    # --- choose a lane-dense 2D view with no padding whenever possible ------
    lanes = None
    for cand in (1024, 512, 256, 128):
        if total % cand == 0:
            lanes = cand
            break

    xf = x.reshape(-1)
    padded_total = total
    if lanes is None:
        # Worst case pads <= 127 elements (one partial 128-lane row).
        lanes = 128
        padded_total = ((total + lanes - 1) // lanes) * lanes
        xf = jnp.pad(xf, (0, padded_total - total))

    rows = padded_total // lanes
    x2d = xf.reshape(rows, lanes)

    # --- block sizing: ~2 MiB per block, sublane-aligned ---------------------
    tile_rows = max(8, _TARGET_BLOCK_BYTES // (lanes * itemsize))
    tile_rows = (tile_rows // 8) * 8

    if rows <= tile_rows:
        # Tiny-input path: one block equal to the full array (always legal).
        block_rows = rows
        grid = (1,)
    else:
        # Streaming path: ragged final block is masked by Pallas; no rounding,
        # no wrapper-side pad/slice passes over HBM.
        block_rows = tile_rows
        grid = (pl.cdiv(rows, tile_rows),)

    n = padded_total
    out = pl.pallas_call(
        _act_kernel,
        out_shape=jax.ShapeDtypeStruct((rows, lanes), dtype),
        grid_spec=pltpu.PrefetchScalarGridSpec(
            num_scalar_prefetch=0,
            grid=grid,
            in_specs=[pl.BlockSpec((block_rows, lanes), lambda i: (i, 0))],
            out_specs=pl.BlockSpec((block_rows, lanes), lambda i: (i, 0)),
        ),
        compiler_params=pltpu.CompilerParams(
            dimension_semantics=("parallel",)),
        cost_estimate=pl.CostEstimate(
            flops=3 * n,               # max + add + mul per element
            transcendentals=n,         # one tanh (EUP) per element
            bytes_accessed=2 * n * itemsize),
    )(x2d)

    out_flat = out.reshape(-1)
    if padded_total != total:
        out_flat = out_flat[:total]
    return out_flat.reshape(orig_shape)


if __name__ == "__main__":
    key = jax.random.PRNGKey(0)

    # NCHW input consistent with the module (small shape).
    x = jax.random.normal(key, (2, 4, 16, 16), dtype=jnp.float32)
    out = jax.block_until_ready(act_rt_forward(x))
    ref = (jnp.maximum(x, 0.0) + jnp.tanh(x)) / 2.0
    assert jnp.allclose(out, ref, atol=1e-6, rtol=1e-6), "mismatch vs reference"

    # Odd, non-128-divisible shape to exercise the (rare) pad path.
    x2 = jax.random.normal(jax.random.PRNGKey(1), (3, 5, 7, 11), dtype=jnp.float32)
    out2 = jax.block_until_ready(act_rt_forward(x2))
    ref2 = (jnp.maximum(x2, 0.0) + jnp.tanh(x2)) / 2.0
    assert jnp.allclose(out2, ref2, atol=1e-6, rtol=1e-6), "mismatch vs reference (pad path)"

    print("KERNEL_OK")
</pallas_src>

<mosaic_0001>
module attributes {stable_mosaic.version = 11 : i64} {
  func.func @_act_kernel(%arg0: i32, %arg1: memref<2x1024xf32, #tpu.memory_space<vmem>>, %arg2: memref<2x1024xf32, #tpu.memory_space<vmem>>) attributes {dimension_semantics = [#tpu.dimension_semantics<parallel>], iteration_bounds = array<i64: 1>, scalar_prefetch = 0 : i64, scratch_operands = 0 : i64, tpu.core_type = #tpu.core_type<tc>, window_params = [{transform_indices = @transform_0, window_bounds = array<i64: 2, 1024>}, {transform_indices = @transform_1, window_bounds = array<i64: 2, 1024>}]} {
    %c0 = arith.constant 0 : index
    %c0_0 = arith.constant 0 : index
    %0 = vector.load %arg1[%c0, %c0_0] : memref<2x1024xf32, #tpu.memory_space<vmem>>, vector<2x1024xf32>
    %cst = arith.constant 0.000000e+00 : f32
    %1 = vector.broadcast %cst : f32 to vector<2x1024xf32>
    %2 = arith.maximumf %0, %1 : vector<2x1024xf32>
    %3 = math.tanh %0 : vector<2x1024xf32>
    %4 = arith.addf %2, %3 : vector<2x1024xf32>
    %cst_1 = arith.constant 5.000000e-01 : f32
    %5 = vector.broadcast %cst_1 : f32 to vector<2x1024xf32>
    %6 = arith.mulf %4, %5 : vector<2x1024xf32>
    %c0_2 = arith.constant 0 : index
    %c0_3 = arith.constant 0 : index
    %7 = vector.load %arg2[%c0_2, %c0_3] : memref<2x1024xf32, #tpu.memory_space<vmem>>, vector<2x1024xf32>
    tpu.vector_store %arg2[%c0_2, %c0_3], %6 {strides = array<i32>} : memref<2x1024xf32, #tpu.memory_space<vmem>>, vector<2x1024xf32>,
    return
  }
  func.func @transform_0(%arg0: i32) -> (i32, i32) {
    %c0_i32 = arith.constant 0 : i32
    %c0_i32_0 = arith.constant 0 : i32
    return %arg0, %c0_i32 : i32, i32
  }
  func.func @transform_1(%arg0: i32) -> (i32, i32) {
    %c0_i32 = arith.constant 0 : i32
    %c0_i32_0 = arith.constant 0 : i32
    return %arg0, %c0_i32 : i32, i32
  }
}

</mosaic_0001>

<llo_original>
// kernel: tpu_custom_call.1
$region0: #{tpu_custom_call.1}
  #allocation0 [shape = 'u32[]', space=smem, size = 0x4, offset = 0x4, fixed_abs, tag = 'smem constant byte address 0x4 - core index']
  #allocation1 [shape = 'u32[144,128]{1,0:T(1,128)}', space=vmem, size = 0x12000, scoped, tag = 'internal scratch']
  %s0 = inlined_call_operand.hbm [shape: f32[2,1024], index: 0, kind: input, shape index: {}]
  %s1 = inlined_call_operand.hbm [shape: f32[2,1024], index: 1, kind: output, shape index: {}]
  %s2 = sld [smem:[#allocation0]]
  $region18: #{tpu_custom_call.1} parent=0
    _
  %s4 = ssub.s32 1, %s2
  %s5 = scalar_select 0, %s4, %s2
  $region1: #{tpu_custom_call.1} parent=0
    #allocation2 [shape = 'u8[8192]{0}', space=vmem, size = 0x2000, scoped, tag = 'input window, operand 0, single buffered']
    #allocation3 [shape = 's32[1]{0}', space=sflag, size = 0x4, scoped, tag = 'scoped memory for tpu_custom_call.1']
    #allocation4 [shape = 's32[1]{0}', space=sflag, size = 0x4, scoped, tag = 'scoped memory for tpu_custom_call.1']
    #allocation5 [shape = 'u8[8192]{0}', space=vmem, size = 0x2000, scoped, tag = 'output window, operand 0, single buffered']
    %6 = vsyncpa [#allocation3], 0
    %7 = vsyncpa [#allocation4], 0
    // Predicated region
    $region2: #{tpu_custom_call.1} parent=1 // pred_check
      _
    $region3: #{tpu_custom_call.1} parent=1 // pred_check_branch
      %9 = sbr.rel (0) target = $region5
    $region4: #{tpu_custom_call.1} parent=1 // pred_region
      %s11 = ssub.s32 256, 256
      %12 = vsyncadd [#allocation3], %s11
      %s14 = sshll.u32 [#allocation2], 4
      %s15 = int_to_ptr.vmem [resolvable:$true] %s14
      %17 = dma.hbm_to_vmem [thread:$0]  %s0, 256, %s15, [#allocation3]
    $region5: #{tpu_custom_call.1} parent=1 // pred_fallthru
      _
    // Predicated region
    $region6: #{tpu_custom_call.1} parent=1 // pred_check
      _
    $region7: #{tpu_custom_call.1} parent=1 // pred_check_branch
      %19 = sbr.rel (0) target = $region9
    $region8: #{tpu_custom_call.1} parent=1 // pred_region
      %20 = dma.done [#allocation3], 256
    $region9: #{tpu_custom_call.1} parent=1 // pred_fallthru
      _
    %v21 = vld [vmem:[#allocation2] sm:$0xff]
    %v22 = vld [vmem:[#allocation2 + $0x8] sm:$0xff]
    %v23 = vmax.f32 %v21, 0.0
    %v24 = vmax.f32 %v22, 0.0
    %v25 = vtanh.pop %v21
    %v26 = vtanh.pop %v22
    %v27 = vadd.f32 %v23, %v25
    %v28 = vadd.f32 %v24, %v26
    %v29 = vmul.f32 %v27, 0.5
    %v30 = vmul.f32 %v28, 0.5
    %31 = vst [vmem:[#allocation5] sm:$0xff] %v29
    %32 = vst [vmem:[#allocation5 + $0x8] sm:$0xff] %v30
    // Predicated region
    $region10: #{tpu_custom_call.1} parent=1 // pred_check
      _
    $region11: #{tpu_custom_call.1} parent=1 // pred_check_branch
      %34 = sbr.rel (0) target = $region13
    $region12: #{tpu_custom_call.1} parent=1 // pred_region
      %s36 = ssub.s32 256, 256
      %37 = vsyncadd [#allocation4], %s36
      %s39 = sshll.u32 [#allocation5], 4
      %s40 = int_to_ptr.vmem [resolvable:$true] %s39
      %42 = dma.vmem_to_hbm [thread:$0]  %s40, 256, %s1, [#allocation4]
    $region13: #{tpu_custom_call.1} parent=1 // pred_fallthru
      _
    // Predicated region
    $region14: #{tpu_custom_call.1} parent=1 // pred_check
      _
    $region15: #{tpu_custom_call.1} parent=1 // pred_check_branch
      %44 = sbr.rel (0) target = $region17
    $region16: #{tpu_custom_call.1} parent=1 // pred_region
      %45 = dma.done [#allocation4], 256
    $region17: #{tpu_custom_call.1} parent=1 // pred_fallthru
      _
    %46 = vsyncpa [#allocation3], 1
    %47 = vsyncpa [#allocation4], 1

</llo_original>
